<compile_context>
chip_gen: v5e
topology: v5e:2x2
jax: 0.10.0
libtpu: 0.0.40
codegen_flags: <defaults>
</compile_context>

<pallas_src>
import jax
import jax.numpy as jnp
from jax.experimental import pallas as pl
from jax.experimental.pallas import tpu as pltpu


def classifier_kernel(x_ref, w_ref, b_ref, o_ref):
    """Fused adaptive-avg-pool(1) + (folded) BatchNorm1d + Linear.

    x_ref: (TN, C, HW)  activation tile in native NCHW-flattened layout
    w_ref: (C, Kp)      linear weight with BN scale and 1/HW pre-folded
    b_ref: (1, Kp)      linear bias with BN shift pre-folded
    o_ref: (TN, Kp)     output logits tile
    """
    x = x_ref[...].astype(jnp.float32)                      # (TN, C, HW)
    # Pooled *sum* over spatial positions; the 1/HW factor is folded into w.
    pooled = jnp.sum(x, axis=-1)                            # (TN, C)
    y = jnp.dot(pooled, w_ref[...],
                preferred_element_type=jnp.float32)         # (TN, Kp)
    o_ref[...] = (y + b_ref[...]).astype(o_ref.dtype)


def _round_up(v, m):
    return ((v + m - 1) // m) * m


def classifier_forward(x_nchw, gamma, beta, running_mean, running_var,
                       linear_w, linear_b):
    """x_nchw: (N, C, H, W) float32. linear_w: (K, C) as in PyTorch."""
    N, C, H, W = x_nchw.shape
    K = linear_w.shape[0]
    HW = H * W
    eps = 1e-5

    # ---- Fold BN (eval mode) and the 1/HW mean into the linear params ----
    scale = gamma * jax.lax.rsqrt(running_var + eps)        # (C,)
    shift = beta - running_mean * scale                     # (C,)
    w_t = linear_w.T                                        # (C, K)
    w_fold = (scale / HW)[:, None] * w_t                    # (C, K)
    b_fold = linear_b + shift @ w_t                         # (K,)

    # ---- Native layout (free reshape of NCHW), spatial axis on lanes ----
    x = x_nchw.reshape(N, C, HW)                            # (N, C, HW)

    # Pad class dim to a multiple of 128 (unmasked lane-dense stores).
    Kp = _round_up(max(K, 1), 128)
    w_p = jnp.zeros((C, Kp), w_fold.dtype).at[:, :K].set(w_fold)
    b_p = jnp.zeros((1, Kp), b_fold.dtype).at[0, :K].set(b_fold)

    # Batch tiling: multiple of 8, capped so a double-buffered x tile stays
    # well inside the default scoped-VMEM limit on all chips.
    bytes_per_sample = C * HW * x.dtype.itemsize
    tn_cap = max(8, ((4 * 1024 * 1024) // max(bytes_per_sample, 1)) // 8 * 8)
    TN = min(128, _round_up(N, 8), tn_cap)
    Np = _round_up(N, TN)
    if Np != N:
        x = jnp.concatenate(
            [x, jnp.zeros((Np - N, C, HW), x.dtype)], axis=0)

    grid = (Np // TN,)

    out = pl.pallas_call(
        classifier_kernel,
        out_shape=jax.ShapeDtypeStruct((Np, Kp), x_nchw.dtype),
        grid=grid,
        in_specs=[
            pl.BlockSpec((TN, C, HW), lambda i: (i, 0, 0)),   # x tile
            pl.BlockSpec((C, Kp), lambda i: (0, 0)),          # resident weight
            pl.BlockSpec((1, Kp), lambda i: (0, 0)),          # resident bias
        ],
        out_specs=pl.BlockSpec((TN, Kp), lambda i: (i, 0)),
        compiler_params=pltpu.CompilerParams(
            dimension_semantics=("parallel",)),
    )(x, w_p, b_p)

    return out[:N, :K]


def reference_forward(x_nchw, gamma, beta, running_mean, running_var,
                      linear_w, linear_b):
    eps = 1e-5
    pooled = jnp.mean(x_nchw, axis=(2, 3))
    scale = gamma / jnp.sqrt(running_var + eps)
    shift = beta - running_mean * scale
    bn = pooled * scale + shift
    return bn @ linear_w.T + linear_b


if __name__ == "__main__":
    # Small shapes consistent with Classfier(dims, num_classes)
    N, C, H, W = 2, 32, 16, 16
    num_classes = 16

    key = jax.random.PRNGKey(0)
    k_x, k_w = jax.random.split(key)

    x = jax.random.normal(k_x, (N, C, H, W), dtype=jnp.float32)

    # BatchNorm1d(dims) default-initialized buffers/params (PyTorch defaults)
    gamma = jnp.ones((C,), jnp.float32)
    beta = jnp.zeros((C,), jnp.float32)
    running_mean = jnp.zeros((C,), jnp.float32)
    running_var = jnp.ones((C,), jnp.float32)

    # Linear(dims, num_classes): trunc_normal_(std=0.02) weight, zero bias
    linear_w = (jax.random.truncated_normal(
        k_w, -2.0, 2.0, (num_classes, C), jnp.float32) * 0.02)
    linear_b = jnp.zeros((num_classes,), jnp.float32)

    out = classifier_forward(x, gamma, beta, running_mean, running_var,
                             linear_w, linear_b)
    out = jax.block_until_ready(out)

    ref = reference_forward(x, gamma, beta, running_mean, running_var,
                            linear_w, linear_b)
    assert out.shape == (N, num_classes)
    assert jnp.allclose(out, ref, atol=1e-5, rtol=1e-4), "mismatch vs reference"

    print("KERNEL_OK")
</pallas_src>

<mosaic_0001>
module attributes {stable_mosaic.version = 11 : i64} {
  func.func @classifier_kernel(%arg0: i32, %arg1: memref<8x32x256xf32, #tpu.memory_space<vmem>>, %arg2: memref<32x128xf32, #tpu.memory_space<vmem>>, %arg3: memref<1x128xf32, #tpu.memory_space<vmem>>, %arg4: memref<8x128xf32, #tpu.memory_space<vmem>>) attributes {dimension_semantics = [#tpu.dimension_semantics<parallel>], iteration_bounds = array<i64: 1>, scalar_prefetch = 0 : i64, scratch_operands = 0 : i64, tpu.core_type = #tpu.core_type<tc>, window_params = [{transform_indices = @transform_0, window_bounds = array<i64: 8, 32, 256>}, {pipeline_mode = #tpu.pipeline_mode<synchronous>, transform_indices = @transform_1, window_bounds = array<i64: 32, 128>}, {pipeline_mode = #tpu.pipeline_mode<synchronous>, transform_indices = @transform_2, window_bounds = array<i64: 1, 128>}, {transform_indices = @transform_3, window_bounds = array<i64: 8, 128>}]} {
    %c0 = arith.constant 0 : index
    %c0_0 = arith.constant 0 : index
    %c0_1 = arith.constant 0 : index
    %0 = vector.load %arg1[%c0, %c0_0, %c0_1] : memref<8x32x256xf32, #tpu.memory_space<vmem>>, vector<8x32x256xf32>
    %cst = arith.constant dense<0.000000e+00> : vector<8x32xf32>
    %1 = vector.multi_reduction <add>, %0, %cst [2] : vector<8x32x256xf32> to vector<8x32xf32>
    %c0_2 = arith.constant 0 : index
    %c0_3 = arith.constant 0 : index
    %2 = vector.load %arg2[%c0_2, %c0_3] : memref<32x128xf32, #tpu.memory_space<vmem>>, vector<32x128xf32>
    %cst_4 = arith.constant dense<0.000000e+00> : vector<8x128xf32>
    %3 = tpu.matmul %1, %2, %cst_4 {dimension_numbers = #tpu.dot_dimension_numbers<[1], [0], [0], [1], [0, 0, 1, 1], [], []>} : vector<8x32xf32>, vector<32x128xf32>, vector<8x128xf32> -> vector<8x128xf32>
    %c0_5 = arith.constant 0 : index
    %c0_6 = arith.constant 0 : index
    %4 = vector.load %arg3[%c0_5, %c0_6] : memref<1x128xf32, #tpu.memory_space<vmem>>, vector<1x128xf32>
    %5 = vector.broadcast %4 : vector<1x128xf32> to vector<8x128xf32>
    %6 = arith.addf %3, %5 : vector<8x128xf32>
    %c0_7 = arith.constant 0 : index
    %c0_8 = arith.constant 0 : index
    %7 = vector.load %arg4[%c0_7, %c0_8] : memref<8x128xf32, #tpu.memory_space<vmem>>, vector<8x128xf32>
    tpu.vector_store %arg4[%c0_7, %c0_8], %6 {strides = array<i32>} : memref<8x128xf32, #tpu.memory_space<vmem>>, vector<8x128xf32>,
    return
  }
  func.func @transform_0(%arg0: i32) -> (i32, i32, i32) {
    %c0_i32 = arith.constant 0 : i32
    %c0_i32_0 = arith.constant 0 : i32
    %c0_i32_1 = arith.constant 0 : i32
    return %arg0, %c0_i32, %c0_i32_0 : i32, i32, i32
  }
  func.func @transform_1(%arg0: i32) -> (i32, i32) {
    %c0_i32 = arith.constant 0 : i32
    %c0_i32_0 = arith.constant 0 : i32
    %c0_i32_1 = arith.constant 0 : i32
    return %c0_i32, %c0_i32_0 : i32, i32
  }
  func.func @transform_2(%arg0: i32) -> (i32, i32) {
    %c0_i32 = arith.constant 0 : i32
    %c0_i32_0 = arith.constant 0 : i32
    %c0_i32_1 = arith.constant 0 : i32
    return %c0_i32, %c0_i32_0 : i32, i32
  }
  func.func @transform_3(%arg0: i32) -> (i32, i32) {
    %c0_i32 = arith.constant 0 : i32
    %c0_i32_0 = arith.constant 0 : i32
    return %arg0, %c0_i32 : i32, i32
  }
}

</mosaic_0001>

<llo_original>
// kernel: tpu_custom_call.1
$region0: #{tpu_custom_call.1}
  #allocation0 [shape = 'u32[]', space=smem, size = 0x4, offset = 0x4, fixed_abs, tag = 'smem constant byte address 0x4 - core index']
  #allocation1 [shape = 'u32[72,128]{1,0:T(1,128)}', space=vmem, size = 0x9000, scoped, tag = 'internal scratch']
  %s0 = inlined_call_operand.hbm [shape: f32[8,32,256], index: 0, kind: input, shape index: {}]
  %s1 = inlined_call_operand.hbm [shape: f32[32,128], index: 1, kind: input, shape index: {}]
  %s2 = inlined_call_operand.vmem [shape: f32[1,128], index: 2, kind: input, shape index: {}]
  %s3 = inlined_call_operand.hbm [shape: f32[8,128], index: 3, kind: output, shape index: {}]
  %s4 = sld [smem:[#allocation0]]
  $region30: #{tpu_custom_call.1} parent=0
    _
  %s6 = ssub.s32 1, %s4
  %s7 = scalar_select 0, %s6, %s4
  $region1: #{tpu_custom_call.1} parent=0
    #allocation2 [shape = 'u8[262144]{0}', space=vmem, size = 0x40000, scoped, tag = 'input window, operand 0, single buffered']
    #allocation3 [shape = 's32[1]{0}', space=sflag, size = 0x4, scoped, tag = 'scoped memory for tpu_custom_call.1']
    #allocation4 [shape = 's32[1]{0}', space=sflag, size = 0x4, scoped, tag = 'scoped memory for tpu_custom_call.1']
    #allocation5 [shape = 'u8[16384]{0}', space=vmem, size = 0x4000, scoped, tag = 'input window, operand 1, single buffered']
    #allocation6 [shape = 's32[1]{0}', space=sflag, size = 0x4, scoped, tag = 'scoped memory for tpu_custom_call.1']
    #allocation7 [shape = 'u8[4096]{0}', space=vmem, size = 0x1000, scoped, tag = 'output window, operand 0, single buffered']
    %8 = vsyncpa [#allocation3], 0
    %9 = vsyncpa [#allocation6], 0
    %10 = vsyncpa [#allocation4], 0
    // Predicated region
    $region2: #{tpu_custom_call.1} parent=1 // pred_check
      _
    $region3: #{tpu_custom_call.1} parent=1 // pred_check_branch
      %12 = sbr.rel (0) target = $region5
    $region4: #{tpu_custom_call.1} parent=1 // pred_region
      %14 = vsyncadd [#allocation3], 0
      %s15 = sshll.u32 %s0, 4
      %s16 = int_to_ptr.hbm [resolvable:$true] %s15
      %s17 = sshll.u32 [#allocation2], 4
      %s18 = int_to_ptr.vmem [resolvable:$true] %s17
      %23 = dma.hbm_to_vmem [thread:$0]  %s16, 8192, %s18, [#allocation3], 256, 256, 16
    $region5: #{tpu_custom_call.1} parent=1 // pred_fallthru
      _
    // Predicated region
    $region6: #{tpu_custom_call.1} parent=1 // pred_check
      _
    $region7: #{tpu_custom_call.1} parent=1 // pred_check_branch
      %25 = sbr.rel (0) target = $region9
    $region8: #{tpu_custom_call.1} parent=1 // pred_region
      %27 = vsyncadd [#allocation6], 0
      %s28 = sshll.u32 %s1, 4
      %s29 = int_to_ptr.hbm [resolvable:$true] %s28
      %s30 = sshll.u32 [#allocation5], 4
      %s31 = int_to_ptr.vmem [resolvable:$true] %s30
      %36 = dma.hbm_to_vmem [thread:$0]  %s29, 512, %s31, [#allocation6], 128, 128, 8
    $region9: #{tpu_custom_call.1} parent=1 // pred_fallthru
      _
    // Predicated region
    $region10: #{tpu_custom_call.1} parent=1 // pred_check
      _
    $region11: #{tpu_custom_call.1} parent=1 // pred_check_branch
      %38 = sbr.rel (0) target = $region13
    $region12: #{tpu_custom_call.1} parent=1 // pred_region
      _
    $region13: #{tpu_custom_call.1} parent=1 // pred_fallthru
      _
    // Predicated region
    $region14: #{tpu_custom_call.1} parent=1 // pred_check
      _
    $region15: #{tpu_custom_call.1} parent=1 // pred_check_branch
      %40 = sbr.rel (0) target = $region17
    $region16: #{tpu_custom_call.1} parent=1 // pred_region
      %42 = dma.done [#allocation3], 8192
    $region17: #{tpu_custom_call.1} parent=1 // pred_fallthru
      _
    // Predicated region
    $region18: #{tpu_custom_call.1} parent=1 // pred_check
      _
    $region19: #{tpu_custom_call.1} parent=1 // pred_check_branch
      %44 = sbr.rel (0) target = $region21
    $region20: #{tpu_custom_call.1} parent=1 // pred_region
      %46 = dma.done [#allocation6], 512
    $region21: #{tpu_custom_call.1} parent=1 // pred_fallthru
      _
    %v47 = vld [vmem:[#allocation2] sm:$0xff]
    %v48 = vld [vmem:[#allocation2 + $0x8] sm:$0xff]
    %v49 = vld [vmem:[#allocation2 + $0x10] sm:$0xff]
    %v50 = vld [vmem:[#allocation2 + $0x18] sm:$0xff]
    %v51 = vld [vmem:[#allocation2 + $0x20] sm:$0xff]
    %v52 = vld [vmem:[#allocation2 + $0x28] sm:$0xff]
    %v53 = vld [vmem:[#allocation2 + $0x30] sm:$0xff]
    %v54 = vld [vmem:[#allocation2 + $0x38] sm:$0xff]
    %v55 = vld [vmem:[#allocation2 + $0x40] sm:$0xff]
    %v56 = vld [vmem:[#allocation2 + $0x48] sm:$0xff]
    %v57 = vld [vmem:[#allocation2 + $0x50] sm:$0xff]
    %v58 = vld [vmem:[#allocation2 + $0x58] sm:$0xff]
    %v59 = vld [vmem:[#allocation2 + $0x60] sm:$0xff]
    %v60 = vld [vmem:[#allocation2 + $0x68] sm:$0xff]
    %v61 = vld [vmem:[#allocation2 + $0x70] sm:$0xff]
    %v62 = vld [vmem:[#allocation2 + $0x78] sm:$0xff]
    %v63 = vld [vmem:[#allocation2 + $0x80] sm:$0xff]
    %v64 = vld [vmem:[#allocation2 + $0x88] sm:$0xff]
    %v65 = vld [vmem:[#allocation2 + $0x90] sm:$0xff]
    %v66 = vld [vmem:[#allocation2 + $0x98] sm:$0xff]
    %v67 = vld [vmem:[#allocation2 + $0xa0] sm:$0xff]
    %v68 = vld [vmem:[#allocation2 + $0xa8] sm:$0xff]
    %v69 = vld [vmem:[#allocation2 + $0xb0] sm:$0xff]
    %v70 = vld [vmem:[#allocation2 + $0xb8] sm:$0xff]
    %v71 = vld [vmem:[#allocation2 + $0xc0] sm:$0xff]
    %v72 = vld [vmem:[#allocation2 + $0xc8] sm:$0xff]
    %v73 = vld [vmem:[#allocation2 + $0xd0] sm:$0xff]
    %v74 = vld [vmem:[#allocation2 + $0xd8] sm:$0xff]
    %v75 = vld [vmem:[#allocation2 + $0xe0] sm:$0xff]
    %v76 = vld [vmem:[#allocation2 + $0xe8] sm:$0xff]
    %v77 = vld [vmem:[#allocation2 + $0xf0] sm:$0xff]
    %v78 = vld [vmem:[#allocation2 + $0xf8] sm:$0xff]
    %v79 = vld [vmem:[#allocation2 + $0x100] sm:$0xff]
    %v80 = vld [vmem:[#allocation2 + $0x108] sm:$0xff]
    %v81 = vld [vmem:[#allocation2 + $0x110] sm:$0xff]
    %v82 = vld [vmem:[#allocation2 + $0x118] sm:$0xff]
    %v83 = vld [vmem:[#allocation2 + $0x120] sm:$0xff]
    %v84 = vld [vmem:[#allocation2 + $0x128] sm:$0xff]
    %v85 = vld [vmem:[#allocation2 + $0x130] sm:$0xff]
    %v86 = vld [vmem:[#allocation2 + $0x138] sm:$0xff]
    %v87 = vld [vmem:[#allocation2 + $0x140] sm:$0xff]
    %v88 = vld [vmem:[#allocation2 + $0x148] sm:$0xff]
    %v89 = vld [vmem:[#allocation2 + $0x150] sm:$0xff]
    %v90 = vld [vmem:[#allocation2 + $0x158] sm:$0xff]
    %v91 = vld [vmem:[#allocation2 + $0x160] sm:$0xff]
    %v92 = vld [vmem:[#allocation2 + $0x168] sm:$0xff]
    %v93 = vld [vmem:[#allocation2 + $0x170] sm:$0xff]
    %v94 = vld [vmem:[#allocation2 + $0x178] sm:$0xff]
    %v95 = vld [vmem:[#allocation2 + $0x180] sm:$0xff]
    %v96 = vld [vmem:[#allocation2 + $0x188] sm:$0xff]
    %v97 = vld [vmem:[#allocation2 + $0x190] sm:$0xff]
    %v98 = vld [vmem:[#allocation2 + $0x198] sm:$0xff]
    %v99 = vld [vmem:[#allocation2 + $0x1a0] sm:$0xff]
    %v100 = vld [vmem:[#allocation2 + $0x1a8] sm:$0xff]
    %v101 = vld [vmem:[#allocation2 + $0x1b0] sm:$0xff]
    %v102 = vld [vmem:[#allocation2 + $0x1b8] sm:$0xff]
    %v103 = vld [vmem:[#allocation2 + $0x1c0] sm:$0xff]
    %v104 = vld [vmem:[#allocation2 + $0x1c8] sm:$0xff]
    %v105 = vld [vmem:[#allocation2 + $0x1d0] sm:$0xff]
    %v106 = vld [vmem:[#allocation2 + $0x1d8] sm:$0xff]
    %v107 = vld [vmem:[#allocation2 + $0x1e0] sm:$0xff]
    %v108 = vld [vmem:[#allocation2 + $0x1e8] sm:$0xff]
    %v109 = vld [vmem:[#allocation2 + $0x1f0] sm:$0xff]
    %v110 = vld [vmem:[#allocation2 + $0x1f8] sm:$0xff]
    %v111 = vadd.f32 %v47, %v48
    %112 = vadd.xlane.f32.xlu0 %v111
    %v113 = vpop.xlane.xlu0 %112
    %v114 = vadd.f32 %v49, %v50
    %115 = vadd.xlane.f32.xlu0 %v114
    %v116 = vpop.xlane.xlu0 %115
    %v117 = vadd.f32 %v51, %v52
    %118 = vadd.xlane.f32.xlu0 %v117
    %v119 = vpop.xlane.xlu0 %118
    %v120 = vadd.f32 %v53, %v54
    %121 = vadd.xlane.f32.xlu0 %v120
    %v122 = vpop.xlane.xlu0 %121
    %v123 = vadd.f32 %v55, %v56
    %124 = vadd.xlane.f32.xlu0 %v123
    %v125 = vpop.xlane.xlu0 %124
    %v126 = vadd.f32 %v57, %v58
    %127 = vadd.xlane.f32.xlu0 %v126
    %v128 = vpop.xlane.xlu0 %127
    %v129 = vadd.f32 %v59, %v60
    %130 = vadd.xlane.f32.xlu0 %v129
    %v131 = vpop.xlane.xlu0 %130
    %v132 = vadd.f32 %v61, %v62
    %133 = vadd.xlane.f32.xlu0 %v132
    %v134 = vpop.xlane.xlu0 %133
    %v135 = vadd.f32 %v63, %v64
    %136 = vadd.xlane.f32.xlu0 %v135
    %v137 = vpop.xlane.xlu0 %136
    %v138 = vadd.f32 %v65, %v66
    %139 = vadd.xlane.f32.xlu0 %v138
    %v140 = vpop.xlane.xlu0 %139
    %v141 = vadd.f32 %v67, %v68
    %142 = vadd.xlane.f32.xlu0 %v141
    %v143 = vpop.xlane.xlu0 %142
    %v144 = vadd.f32 %v69, %v70
    %145 = vadd.xlane.f32.xlu0 %v144
    %v146 = vpop.xlane.xlu0 %145
    %v147 = vadd.f32 %v71, %v72
    %148 = vadd.xlane.f32.xlu0 %v147
    %v149 = vpop.xlane.xlu0 %148
    %v150 = vadd.f32 %v73, %v74
    %151 = vadd.xlane.f32.xlu0 %v150
    %v152 = vpop.xlane.xlu0 %151
    %v153 = vadd.f32 %v75, %v76
    %154 = vadd.xlane.f32.xlu0 %v153
    %v155 = vpop.xlane.xlu0 %154
    %v156 = vadd.f32 %v77, %v78
    %157 = vadd.xlane.f32.xlu0 %v156
    %v158 = vpop.xlane.xlu0 %157
    %v159 = vadd.f32 %v79, %v80
    %160 = vadd.xlane.f32.xlu0 %v159
    %v161 = vpop.xlane.xlu0 %160
    %v162 = vadd.f32 %v81, %v82
    %163 = vadd.xlane.f32.xlu0 %v162
    %v164 = vpop.xlane.xlu0 %163
    %v165 = vadd.f32 %v83, %v84
    %166 = vadd.xlane.f32.xlu0 %v165
    %v167 = vpop.xlane.xlu0 %166
    %v168 = vadd.f32 %v85, %v86
    %169 = vadd.xlane.f32.xlu0 %v168
    %v170 = vpop.xlane.xlu0 %169
    %v171 = vadd.f32 %v87, %v88
    %172 = vadd.xlane.f32.xlu0 %v171
    %v173 = vpop.xlane.xlu0 %172
    %v174 = vadd.f32 %v89, %v90
    %175 = vadd.xlane.f32.xlu0 %v174
    %v176 = vpop.xlane.xlu0 %175
    %v177 = vadd.f32 %v91, %v92
    %178 = vadd.xlane.f32.xlu0 %v177
    %v179 = vpop.xlane.xlu0 %178
    %v180 = vadd.f32 %v93, %v94
    %181 = vadd.xlane.f32.xlu0 %v180
    %v182 = vpop.xlane.xlu0 %181
    %v183 = vadd.f32 %v95, %v96
    %184 = vadd.xlane.f32.xlu0 %v183
    %v185 = vpop.xlane.xlu0 %184
    %v186 = vadd.f32 %v97, %v98
    %187 = vadd.xlane.f32.xlu0 %v186
    %v188 = vpop.xlane.xlu0 %187
    %v189 = vadd.f32 %v99, %v100
    %190 = vadd.xlane.f32.xlu0 %v189
    %v191 = vpop.xlane.xlu0 %190
    %v192 = vadd.f32 %v101, %v102
    %193 = vadd.xlane.f32.xlu0 %v192
    %v194 = vpop.xlane.xlu0 %193
    %v195 = vadd.f32 %v103, %v104
    %196 = vadd.xlane.f32.xlu0 %v195
    %v197 = vpop.xlane.xlu0 %196
    %v198 = vadd.f32 %v105, %v106
    %199 = vadd.xlane.f32.xlu0 %v198
    %v200 = vpop.xlane.xlu0 %199
    %v201 = vadd.f32 %v107, %v108
    %202 = vadd.xlane.f32.xlu0 %v201
    %v203 = vpop.xlane.xlu0 %202
    %v204 = vadd.f32 %v109, %v110
    %205 = vadd.xlane.f32.xlu0 %v204
    %v206 = vpop.xlane.xlu0 %205
    %v207 = vld [vmem:[#allocation5] sm:$0xff]
    %v208 = vld [vmem:[#allocation5 + $0x8] sm:$0xff]
    %v209 = vld [vmem:[#allocation5 + $0x10] sm:$0xff]
    %v210 = vld [vmem:[#allocation5 + $0x18] sm:$0xff]
    %v211 = vld [vmem:[%s2] sm:$0x1]
    %v213 = vperm.slane %v211, 0
    %v247 = vlaneseq
    %v248 = vand.u32 %v247, 127
    %v249 = vperm.slane %v113, %v248
    %v250 = vadd.s32 %v248, 4294967288
    %v251 = vperm.slane %v116, %v250
    %vm252 = vcmask 130112
    %v253 = vsel %vm252, %v251, %v249
    %v254 = vadd.s32 %v248, 4294967280
    %v255 = vperm.slane %v119, %v254
    %vm256 = vcmask 195712
    %v257 = vsel %vm256, %v255, %v253
    %v258 = vadd.s32 %v248, 4294967272
    %v259 = vperm.slane %v122, %v258
    %vm260 = vcmask 261312
    %v261 = vsel %vm260, %v259, %v257
    %v262 = vperm.slane %v125, %v248
    %v263 = vperm.slane %v128, %v250
    %v264 = vsel %vm252, %v263, %v262
    %v265 = vperm.slane %v131, %v254
    %v266 = vsel %vm256, %v265, %v264
    %v267 = vperm.slane %v134, %v258
    %v268 = vsel %vm260, %v267, %v266
    %v269 = vperm.slane %v137, %v248
    %v270 = vperm.slane %v140, %v250
    %v271 = vsel %vm252, %v270, %v269
    %v272 = vperm.slane %v143, %v254
    %v273 = vsel %vm256, %v272, %v271
    %v274 = vperm.slane %v146, %v258
    %v275 = vsel %vm260, %v274, %v273
    %v276 = vperm.slane %v149, %v248
    %v277 = vperm.slane %v152, %v250
    %v278 = vsel %vm252, %v277, %v276
    %v279 = vperm.slane %v155, %v254
    %v280 = vsel %vm256, %v279, %v278
    %v281 = vperm.slane %v158, %v258
    %v282 = vsel %vm260, %v281, %v280
    %v283 = vperm.slane %v161, %v248
    %v284 = vperm.slane %v164, %v250
    %v285 = vsel %vm252, %v284, %v283
    %v286 = vperm.slane %v167, %v254
    %v287 = vsel %vm256, %v286, %v285
    %v288 = vperm.slane %v170, %v258
    %v289 = vsel %vm260, %v288, %v287
    %v290 = vperm.slane %v173, %v248
    %v291 = vperm.slane %v176, %v250
    %v292 = vsel %vm252, %v291, %v290
    %v293 = vperm.slane %v179, %v254
    %v294 = vsel %vm256, %v293, %v292
    %v295 = vperm.slane %v182, %v258
    %v296 = vsel %vm260, %v295, %v294
    %v297 = vperm.slane %v185, %v248
    %v298 = vperm.slane %v188, %v250
    %v299 = vsel %vm252, %v298, %v297
    %v300 = vperm.slane %v191, %v254
    %v301 = vsel %vm256, %v300, %v299
    %v302 = vperm.slane %v194, %v258
    %v303 = vsel %vm260, %v302, %v301
    %v304 = vperm.slane %v197, %v248
    %v305 = vperm.slane %v200, %v250
    %v306 = vsel %vm252, %v305, %v304
    %v307 = vperm.slane %v203, %v254
    %v308 = vsel %vm256, %v307, %v306
    %v309 = vperm.slane %v206, %v258
    %v310 = vsel %vm260, %v309, %v308
    %vm311 = vcmask 1041409
    %v312 = vsel %vm311, %v268, %v261
    %vm313 = vcmask 1042434
    %v314 = vsel %vm313, %v275, %v312
    %vm315 = vcmask 1043459
    %v316 = vsel %vm315, %v282, %v314
    %vm317 = vcmask 1044484
    %v318 = vsel %vm317, %v289, %v316
    %vm319 = vcmask 1045509
    %v320 = vsel %vm319, %v296, %v318
    %vm321 = vcmask 1046534
    %v322 = vsel %vm321, %v303, %v320
    %vm323 = vcmask 1047559
    %v324 = vsel %vm323, %v310, %v322
    %vm325 = vcmask 261120
    %v326 = vsel %vm325, %v324, 0
    %328 = vmatpush.msra.mxu0 0.0
    %329 = vmatpush.msra.mxu0 0.0
    %330 = vmatpush.msra.mxu0 0.0
    %331 = vmatpush.msra.mxu0 0.0
    %332 = vmatpush.msra.mxu0 0.0
    %333 = vmatpush.msra.mxu0 0.0
    %334 = vmatpush.msra.mxu0 0.0
    %335 = vmatpush.msra.mxu0 0.0
    %336 = vmatpush.msra.mxu0 0.0
    %337 = vmatpush.msra.mxu0 0.0
    %338 = vmatpush.msra.mxu0 0.0
    %339 = vmatpush.msra.mxu0 0.0
    %340 = vmatpush.msra.mxu0 %v210
    %341 = vmatpush.msra.mxu0 %v209
    %342 = vmatpush.msra.mxu0 %v208
    %343 = vmatpush.msra.mxu0 %v207
    %344 = vmatmul.f32.gmra.mxu0 %v326
    %v345 = vpop.f32.mrf.mxu0
    %v346 = vadd.f32 %v213, %v345
    %347 = vdwg.mxu0
    %348 = vst [vmem:[#allocation7] sm:$0xff] %v346
    // Predicated region
    $region22: #{tpu_custom_call.1} parent=1 // pred_check
      _
    $region23: #{tpu_custom_call.1} parent=1 // pred_check_branch
      %350 = sbr.rel (0) target = $region25
    $region24: #{tpu_custom_call.1} parent=1 // pred_region
      %352 = vsyncadd [#allocation4], 0
      %s354 = sshll.u32 [#allocation7], 4
      %s355 = int_to_ptr.vmem [resolvable:$true] %s354
      %s356 = sshll.u32 %s3, 4
      %s357 = int_to_ptr.hbm [resolvable:$true] %s356
      %359 = dma.vmem_to_hbm [thread:$0]  %s355, 128, %s357, [#allocation4]
    $region25: #{tpu_custom_call.1} parent=1 // pred_fallthru
      _
    // Predicated region
    $region26: #{tpu_custom_call.1} parent=1 // pred_check
      _
    $region27: #{tpu_custom_call.1} parent=1 // pred_check_branch
      %361 = sbr.rel (0) target = $region29
    $region28: #{tpu_custom_call.1} parent=1 // pred_region
      %363 = dma.done [#allocation4], 128
    $region29: #{tpu_custom_call.1} parent=1 // pred_fallthru
      _
    %364 = vsyncpa [#allocation3], 1
    %365 = vsyncpa [#allocation6], 1
    %366 = vsyncpa [#allocation4], 1

</llo_original>
